<compile_context>
chip_gen: v7x
topology: tpu7x:2x2x1
jax: 0.10.0
libtpu: 0.0.40
codegen_flags: <defaults>
</compile_context>

<pallas_src>
import functools

import jax
import jax.numpy as jnp
from jax.experimental import pallas as pl
from jax.experimental.pallas import tpu as pltpu

_LANES = 128
_SUBLANES = 8
_TILE_R = 2048  # rows per grid step: 2048 * 128 * 4B = 1 MiB per f32 stream


def _noise_prng_kernel(x_ref, seed_ref, o_ref, *, sigma):
    # Re-seed the hardware PRNG per grid step so every tile draws an
    # independent stream; the noise never touches HBM.
    pltpu.prng_seed(seed_ref[0] + pl.program_id(0))
    noise = pltpu.stateful_normal(x_ref.shape, jnp.float32)
    xf = x_ref[...].astype(jnp.float32)
    o_ref[...] = (xf * (1.0 + sigma * noise)).astype(o_ref.dtype)


def _noise_host_kernel(x_ref, noise_ref, o_ref, *, sigma):
    xf = x_ref[...].astype(jnp.float32)
    o_ref[...] = (xf * (1.0 + sigma * noise_ref[...])).astype(o_ref.dtype)


def _run_prng(x2, seed_arr, tile_r, sigma):
    rows, _ = x2.shape
    grid = (pl.cdiv(rows, tile_r),)
    return pl.pallas_call(
        functools.partial(_noise_prng_kernel, sigma=float(sigma)),
        out_shape=jax.ShapeDtypeStruct(x2.shape, x2.dtype),
        grid=grid,
        in_specs=[
            pl.BlockSpec((tile_r, _LANES), lambda i: (i, 0)),    # x tile (VMEM)
            pl.BlockSpec(memory_space=pltpu.MemorySpace.SMEM),   # scalar seed
        ],
        out_specs=pl.BlockSpec((tile_r, _LANES), lambda i: (i, 0)),
        input_output_aliases={0: 0},  # write the noised values back over x's slab
        compiler_params=pltpu.CompilerParams(
            dimension_semantics=("parallel",)),
        cost_estimate=pl.CostEstimate(
            flops=4 * x2.size,
            transcendentals=x2.size,
            bytes_accessed=2 * x2.size * x2.dtype.itemsize),
    )(x2, seed_arr)


def _run_hostnoise(x2, noise2, tile_r, sigma):
    rows, _ = x2.shape
    grid = (pl.cdiv(rows, tile_r),)
    return pl.pallas_call(
        functools.partial(_noise_host_kernel, sigma=float(sigma)),
        out_shape=jax.ShapeDtypeStruct(x2.shape, x2.dtype),
        grid=grid,
        in_specs=[
            pl.BlockSpec((tile_r, _LANES), lambda i: (i, 0)),    # x tile
            pl.BlockSpec((tile_r, _LANES), lambda i: (i, 0)),    # noise tile
        ],
        out_specs=pl.BlockSpec((tile_r, _LANES), lambda i: (i, 0)),
        input_output_aliases={0: 0},
        compiler_params=pltpu.CompilerParams(
            dimension_semantics=("parallel",)),
        cost_estimate=pl.CostEstimate(
            flops=3 * x2.size,
            transcendentals=0,
            bytes_accessed=3 * x2.size * x2.dtype.itemsize),
    )(x2, noise2)


def gaussian_noise(x, key, *, sigma=0.1, training=True, is_relative_detach=True,
                   tile_rows=_TILE_R):
    """JAX/Pallas equivalent of GaussianNoise.forward.

    x:   float array, any shape (NCHW in the tests).
    key: jax.random key used to seed the in-kernel hardware PRNG.
    """
    del is_relative_detach  # gradient-only semantic; forward values are unaffected.
    if (not training) or sigma == 0:
        return x

    orig_shape = x.shape
    total = x.size

    # Flatten and pad to a multiple of 8*128 so the slab is (8,128)-tile dense.
    chunk = _LANES * _SUBLANES
    padded = pl.cdiv(total, chunk) * chunk
    x_flat = x.reshape(-1)
    if padded != total:
        x_flat = jnp.pad(x_flat, (0, padded - total))
    rows = padded // _LANES
    x2 = x_flat.reshape(rows, _LANES)

    tile_r = min(int(tile_rows), rows)
    tile_r = max(_SUBLANES, (tile_r // _SUBLANES) * _SUBLANES)

    # Fold the jax.random key into a 32-bit seed for the in-kernel hardware PRNG.
    seed_arr = jax.random.bits(key, (1,), jnp.uint32).astype(jnp.int32)

    try:
        out2 = _run_prng(x2, seed_arr, tile_r, sigma)
        out2 = jax.block_until_ready(out2)  # surface any async failure here
    except Exception:
        # TODO(synk): fallback for stacks without pltpu.stateful_* lowering;
        # costs one extra HBM stream for the host-generated noise.
        noise2 = jax.random.normal(key, (rows, _LANES), dtype=jnp.float32)
        out2 = _run_hostnoise(x2, noise2, tile_r, sigma)

    return out2.reshape(-1)[:total].reshape(orig_shape)


if __name__ == "__main__":
    key = jax.random.PRNGKey(0)
    kx, kn = jax.random.split(key)

    # Small NCHW input consistent with a conv-style feature map.
    x = jax.random.normal(kx, (2, 4, 16, 16), dtype=jnp.float32)
    sigma = 0.1

    # Training-mode forward (adds relative Gaussian noise).
    y = gaussian_noise(x, kn, sigma=sigma, training=True)
    y = jax.block_until_ready(y)
    assert y.shape == x.shape and y.dtype == x.dtype
    assert bool(jnp.all(jnp.isfinite(y)))

    # Statistical check: noise_est = (y - x) / (sigma * x) should be ~N(0, 1).
    mask = jnp.abs(x) > 0.05
    noise_est = jnp.where(mask, (y - x) / (sigma * x), 0.0)
    n = jnp.sum(mask)
    mean = jnp.sum(noise_est) / n
    var = jnp.sum(jnp.where(mask, (noise_est - mean) ** 2, 0.0)) / n
    std = jnp.sqrt(var)
    assert abs(float(mean)) < 0.25, float(mean)
    assert 0.75 < float(std) < 1.25, float(std)

    # Eval-mode forward is the identity (matches self.training == False).
    y_eval = gaussian_noise(x, kn, sigma=sigma, training=False)
    assert jnp.array_equal(y_eval, x)

    # sigma == 0 is also the identity.
    y_zero = gaussian_noise(x, kn, sigma=0.0, training=True)
    assert jnp.array_equal(y_zero, x)

    print("KERNEL_OK")
</pallas_src>

<mosaic_0001>
module attributes {stable_mosaic.version = 11 : i64} {
  func.func @_noise_prng_kernel(%arg0: i32, %arg1: memref<16x128xf32, #tpu.memory_space<vmem>>, %arg2: memref<1xi32, #tpu.memory_space<smem>>, %arg3: memref<16x128xf32, #tpu.memory_space<vmem>>) attributes {dimension_semantics = [#tpu.dimension_semantics<parallel>], iteration_bounds = array<i64: 1>, scalar_prefetch = 0 : i64, scratch_operands = 0 : i64, tpu.core_type = #tpu.core_type<tc>, window_params = [{transform_indices = @transform_0, window_bounds = array<i64: 16, 128>}, {transform_indices = @transform_1, window_bounds = array<i64: 1>}, {transform_indices = @transform_2, window_bounds = array<i64: 16, 128>}]} {
    %c0 = arith.constant 0 : index
    %0 = memref.load %arg2[%c0] : memref<1xi32, #tpu.memory_space<smem>>
    %1 = arith.addi %0, %arg0 : i32
    "tpu.prng_set_seed_32"(%1) : (i32) -> ()
    %c0_i32 = arith.constant 0 : i32
    %c0_i32_0 = arith.constant 0 : i32
    %cst = arith.constant -0.99999994 : f32
    %cst_1 = arith.constant 1.000000e+00 : f32
    %2 = vector.broadcast %cst : f32 to vector<1x1xf32>
    %3 = vector.broadcast %cst_1 : f32 to vector<1x1xf32>
    %4 = "tpu.prng_random_bits"() : () -> vector<16x128xi32>
    %c9_i32 = arith.constant 9 : i32
    %5 = vector.broadcast %c9_i32 : i32 to vector<16x128xi32>
    %6 = arith.shrui %4, %5 : vector<16x128xi32>
    %c1065353216_i32 = arith.constant 1065353216 : i32
    %7 = vector.broadcast %c1065353216_i32 : i32 to vector<16x128xi32>
    %8 = arith.ori %6, %7 : vector<16x128xi32>
    %9 = tpu.bitcast %8 : vector<16x128xi32> -> vector<16x128xf32>
    %cst_2 = arith.constant 1.000000e+00 : f32
    %10 = vector.broadcast %cst_2 : f32 to vector<16x128xf32>
    %11 = arith.subf %9, %10 : vector<16x128xf32>
    %12 = arith.subf %3, %2 : vector<1x1xf32>
    %13 = vector.broadcast %12 : vector<1x1xf32> to vector<16x128xf32>
    %14 = arith.mulf %11, %13 : vector<16x128xf32>
    %15 = vector.broadcast %2 : vector<1x1xf32> to vector<16x128xf32>
    %16 = arith.addf %14, %15 : vector<16x128xf32>
    %17 = vector.broadcast %2 : vector<1x1xf32> to vector<16x128xf32>
    %18 = arith.maximumf %17, %16 : vector<16x128xf32>
    %cst_3 = arith.constant 0.000000e+00 : f32
    %19 = vector.broadcast %cst_3 : f32 to vector<16x128xf32>
    %20 = arith.subf %19, %18 : vector<16x128xf32>
    %21 = arith.mulf %18, %20 : vector<16x128xf32>
    %22 = math.log1p %21 : vector<16x128xf32>
    %cst_4 = arith.constant 0.000000e+00 : f32
    %23 = vector.broadcast %cst_4 : f32 to vector<16x128xf32>
    %24 = arith.subf %23, %22 : vector<16x128xf32>
    %cst_5 = arith.constant 5.000000e+00 : f32
    %25 = vector.broadcast %cst_5 : f32 to vector<16x128xf32>
    %26 = arith.cmpf olt, %24, %25 : vector<16x128xf32>
    %cst_6 = arith.constant 2.500000e+00 : f32
    %27 = vector.broadcast %cst_6 : f32 to vector<16x128xf32>
    %28 = arith.subf %24, %27 : vector<16x128xf32>
    %29 = math.sqrt %24 : vector<16x128xf32>
    %cst_7 = arith.constant 3.000000e+00 : f32
    %30 = vector.broadcast %cst_7 : f32 to vector<16x128xf32>
    %31 = arith.subf %29, %30 : vector<16x128xf32>
    %32 = arith.select %26, %28, %31 : vector<16x128xi1>, vector<16x128xf32>
    %cst_8 = arith.constant 2.81022636E-8 : f32
    %cst_9 = arith.constant -2.00214257E-4 : f32
    %33 = vector.broadcast %cst_8 : f32 to vector<16x128xf32>
    %34 = vector.broadcast %cst_9 : f32 to vector<16x128xf32>
    %35 = arith.select %26, %33, %34 : vector<16x128xi1>, vector<16x128xf32>
    %cst_10 = arith.constant 3.43273939E-7 : f32
    %cst_11 = arith.constant 1.00950558E-4 : f32
    %36 = vector.broadcast %cst_10 : f32 to vector<16x128xf32>
    %37 = vector.broadcast %cst_11 : f32 to vector<16x128xf32>
    %38 = arith.select %26, %36, %37 : vector<16x128xi1>, vector<16x128xf32>
    %39 = arith.mulf %35, %32 : vector<16x128xf32>
    %40 = arith.addf %38, %39 : vector<16x128xf32>
    %cst_12 = arith.constant -3.5233877E-6 : f32
    %cst_13 = arith.constant 0.00134934322 : f32
    %41 = vector.broadcast %cst_12 : f32 to vector<16x128xf32>
    %42 = vector.broadcast %cst_13 : f32 to vector<16x128xf32>
    %43 = arith.select %26, %41, %42 : vector<16x128xi1>, vector<16x128xf32>
    %44 = arith.mulf %40, %32 : vector<16x128xf32>
    %45 = arith.addf %43, %44 : vector<16x128xf32>
    %cst_14 = arith.constant -4.39150654E-6 : f32
    %cst_15 = arith.constant -0.00367342844 : f32
    %46 = vector.broadcast %cst_14 : f32 to vector<16x128xf32>
    %47 = vector.broadcast %cst_15 : f32 to vector<16x128xf32>
    %48 = arith.select %26, %46, %47 : vector<16x128xi1>, vector<16x128xf32>
    %49 = arith.mulf %45, %32 : vector<16x128xf32>
    %50 = arith.addf %48, %49 : vector<16x128xf32>
    %cst_16 = arith.constant 2.1858087E-4 : f32
    %cst_17 = arith.constant 0.00573950773 : f32
    %51 = vector.broadcast %cst_16 : f32 to vector<16x128xf32>
    %52 = vector.broadcast %cst_17 : f32 to vector<16x128xf32>
    %53 = arith.select %26, %51, %52 : vector<16x128xi1>, vector<16x128xf32>
    %54 = arith.mulf %50, %32 : vector<16x128xf32>
    %55 = arith.addf %53, %54 : vector<16x128xf32>
    %cst_18 = arith.constant -0.00125372503 : f32
    %cst_19 = arith.constant -0.0076224613 : f32
    %56 = vector.broadcast %cst_18 : f32 to vector<16x128xf32>
    %57 = vector.broadcast %cst_19 : f32 to vector<16x128xf32>
    %58 = arith.select %26, %56, %57 : vector<16x128xi1>, vector<16x128xf32>
    %59 = arith.mulf %55, %32 : vector<16x128xf32>
    %60 = arith.addf %58, %59 : vector<16x128xf32>
    %cst_20 = arith.constant -0.00417768164 : f32
    %cst_21 = arith.constant 0.00943887047 : f32
    %61 = vector.broadcast %cst_20 : f32 to vector<16x128xf32>
    %62 = vector.broadcast %cst_21 : f32 to vector<16x128xf32>
    %63 = arith.select %26, %61, %62 : vector<16x128xi1>, vector<16x128xf32>
    %64 = arith.mulf %60, %32 : vector<16x128xf32>
    %65 = arith.addf %63, %64 : vector<16x128xf32>
    %cst_22 = arith.constant 0.246640727 : f32
    %cst_23 = arith.constant 1.00167406 : f32
    %66 = vector.broadcast %cst_22 : f32 to vector<16x128xf32>
    %67 = vector.broadcast %cst_23 : f32 to vector<16x128xf32>
    %68 = arith.select %26, %66, %67 : vector<16x128xi1>, vector<16x128xf32>
    %69 = arith.mulf %65, %32 : vector<16x128xf32>
    %70 = arith.addf %68, %69 : vector<16x128xf32>
    %cst_24 = arith.constant 1.50140941 : f32
    %cst_25 = arith.constant 2.83297682 : f32
    %71 = vector.broadcast %cst_24 : f32 to vector<16x128xf32>
    %72 = vector.broadcast %cst_25 : f32 to vector<16x128xf32>
    %73 = arith.select %26, %71, %72 : vector<16x128xi1>, vector<16x128xf32>
    %74 = arith.mulf %70, %32 : vector<16x128xf32>
    %75 = arith.addf %73, %74 : vector<16x128xf32>
    %76 = math.absf %18 : vector<16x128xf32>
    %cst_26 = arith.constant 1.000000e+00 : f32
    %77 = vector.broadcast %cst_26 : f32 to vector<16x128xf32>
    %78 = arith.cmpf oeq, %76, %77 : vector<16x128xf32>
    %cst_27 = arith.constant 0x7F800000 : f32
    %79 = vector.broadcast %cst_27 : f32 to vector<16x128xf32>
    %80 = arith.mulf %79, %18 : vector<16x128xf32>
    %81 = arith.mulf %75, %18 : vector<16x128xf32>
    %82 = arith.select %78, %80, %81 : vector<16x128xi1>, vector<16x128xf32>
    %cst_28 = arith.constant 1.41421354 : f32
    %83 = vector.broadcast %cst_28 : f32 to vector<16x128xf32>
    %84 = arith.mulf %83, %82 : vector<16x128xf32>
    %c0_29 = arith.constant 0 : index
    %c0_30 = arith.constant 0 : index
    %85 = vector.load %arg1[%c0_29, %c0_30] : memref<16x128xf32, #tpu.memory_space<vmem>>, vector<16x128xf32>
    %cst_31 = arith.constant 1.000000e-01 : f32
    %86 = vector.broadcast %cst_31 : f32 to vector<16x128xf32>
    %87 = arith.mulf %86, %84 : vector<16x128xf32>
    %cst_32 = arith.constant 1.000000e+00 : f32
    %88 = vector.broadcast %cst_32 : f32 to vector<16x128xf32>
    %89 = arith.addf %88, %87 : vector<16x128xf32>
    %90 = arith.mulf %85, %89 : vector<16x128xf32>
    %c0_33 = arith.constant 0 : index
    %c0_34 = arith.constant 0 : index
    %91 = vector.load %arg3[%c0_33, %c0_34] : memref<16x128xf32, #tpu.memory_space<vmem>>, vector<16x128xf32>
    tpu.vector_store %arg3[%c0_33, %c0_34], %90 {strides = array<i32>} : memref<16x128xf32, #tpu.memory_space<vmem>>, vector<16x128xf32>,
    return
  }
  func.func @transform_0(%arg0: i32) -> (i32, i32) {
    %c0_i32 = arith.constant 0 : i32
    %c0_i32_0 = arith.constant 0 : i32
    return %arg0, %c0_i32 : i32, i32
  }
  func.func @transform_1(%arg0: i32) -> i32 {
    %c0_i32 = arith.constant 0 : i32
    %c0_i32_0 = arith.constant 0 : i32
    return %c0_i32 : i32
  }
  func.func @transform_2(%arg0: i32) -> (i32, i32) {
    %c0_i32 = arith.constant 0 : i32
    %c0_i32_0 = arith.constant 0 : i32
    return %arg0, %c0_i32 : i32, i32
  }
}

module attributes {stable_mosaic.version = 11 : i64} {
  func.func @_noise_host_kernel(%arg0: i32, %arg1: memref<16x128xf32, #tpu.memory_space<vmem>>, %arg2: memref<16x128xf32, #tpu.memory_space<vmem>>, %arg3: memref<16x128xf32, #tpu.memory_space<vmem>>) attributes {dimension_semantics = [#tpu.dimension_semantics<parallel>], iteration_bounds = array<i64: 1>, scalar_prefetch = 0 : i64, scratch_operands = 0 : i64, tpu.core_type = #tpu.core_type<tc>, window_params = [{transform_indices = @transform_0, window_bounds = array<i64: 16, 128>}, {transform_indices = @transform_1, window_bounds = array<i64: 16, 128>}, {transform_indices = @transform_2, window_bounds = array<i64: 16, 128>}]} {
    %c0 = arith.constant 0 : index
    %c0_0 = arith.constant 0 : index
    %0 = vector.load %arg1[%c0, %c0_0] : memref<16x128xf32, #tpu.memory_space<vmem>>, vector<16x128xf32>
    %c0_1 = arith.constant 0 : index
    %c0_2 = arith.constant 0 : index
    %1 = vector.load %arg2[%c0_1, %c0_2] : memref<16x128xf32, #tpu.memory_space<vmem>>, vector<16x128xf32>
    %cst = arith.constant 1.000000e-01 : f32
    %2 = vector.broadcast %cst : f32 to vector<16x128xf32>
    %3 = arith.mulf %2, %1 : vector<16x128xf32>
    %cst_3 = arith.constant 1.000000e+00 : f32
    %4 = vector.broadcast %cst_3 : f32 to vector<16x128xf32>
    %5 = arith.addf %4, %3 : vector<16x128xf32>
    %6 = arith.mulf %0, %5 : vector<16x128xf32>
    %c0_4 = arith.constant 0 : index
    %c0_5 = arith.constant 0 : index
    %7 = vector.load %arg3[%c0_4, %c0_5] : memref<16x128xf32, #tpu.memory_space<vmem>>, vector<16x128xf32>
    tpu.vector_store %arg3[%c0_4, %c0_5], %6 {strides = array<i32>} : memref<16x128xf32, #tpu.memory_space<vmem>>, vector<16x128xf32>,
    return
  }
  func.func @transform_0(%arg0: i32) -> (i32, i32) {
    %c0_i32 = arith.constant 0 : i32
    %c0_i32_0 = arith.constant 0 : i32
    return %arg0, %c0_i32 : i32, i32
  }
  func.func @transform_1(%arg0: i32) -> (i32, i32) {
    %c0_i32 = arith.constant 0 : i32
    %c0_i32_0 = arith.constant 0 : i32
    return %arg0, %c0_i32 : i32, i32
  }
  func.func @transform_2(%arg0: i32) -> (i32, i32) {
    %c0_i32 = arith.constant 0 : i32
    %c0_i32_0 = arith.constant 0 : i32
    return %arg0, %c0_i32 : i32, i32
  }
}

</mosaic_0001>

<llo_original>
// kernel: tpu_custom_call.1
$region0: #{tpu_custom_call.1}
  #allocation0 [shape = 'u32[]', space=smem, size = 0x4, offset = 0x4, fixed_abs, tag = 'smem constant byte address 0x4 - core index']
  #allocation1 [shape = 'u32[144,128]{1,0:T(1,128)}', space=vmem, size = 0x12000, scoped, tag = 'internal scratch']
  #allocation2 [shape = 's32[1]{0:T(128)S(6)}', space=smem, size = 0x200, scoped, tag = 'scoped memory for tpu_custom_call.1']
  %s0 = inlined_call_operand.hbm [shape: f32[16,128], index: 0, kind: input, shape index: {}, may-alias: {0,2}]
  %s1 = inlined_call_operand.<no memory space> [shape: s32[1], index: 1, kind: input, shape index: {}]
  %s2 = inlined_call_operand.hbm [shape: f32[16,128], index: 2, kind: output, shape index: {}, may-alias: {0,2}]
  %s3 = sld [smem:[#allocation0]]
  $region22: #{tpu_custom_call.1} parent=0
    _
  %s5 = ssub.s32 1, %s3
  %s6 = scalar_select 0, %s5, %s3
  %7 = sst [smem:[#allocation2]] %s1
  $region1: #{tpu_custom_call.1} parent=0
    #allocation3 [shape = 'u8[8192]{0}', space=vmem, size = 0x2000, scoped, tag = 'input window, operand 0, single buffered']
    #allocation4 [shape = 's32[1]{0}', space=sflag, size = 0x4, scoped, tag = 'scoped memory for tpu_custom_call.1']
    #allocation5 [shape = 's32[1]{0}', space=sflag, size = 0x4, scoped, tag = 'scoped memory for tpu_custom_call.1']
    #allocation6 [shape = 'u8[8192]{0}', space=vmem, size = 0x2000, scoped, tag = 'output window, operand 0, single buffered']
    %8 = vsyncpa [#allocation4], 0
    %9 = vsyncpa [#allocation5], 0
    // Predicated region
    $region2: #{tpu_custom_call.1} parent=1 // pred_check
      _
    $region3: #{tpu_custom_call.1} parent=1 // pred_check_branch
      %11 = sbr.rel (0) target = $region5
    $region4: #{tpu_custom_call.1} parent=1 // pred_region
      %s13 = ssub.s32 256, 256
      %14 = vsyncadd [#allocation4], %s13
      %s15 = sshll.u32 [#allocation3], 4
      %s16 = int_to_ptr.vmem [resolvable:$true] %s15
      %21 = dma.hbm_to_vmem [thread:$0]  %s0, 256, %s16, [#allocation4], 128, 128, 8
    $region5: #{tpu_custom_call.1} parent=1 // pred_fallthru
      _
    // Predicated region
    $region6: #{tpu_custom_call.1} parent=1 // pred_check
      _
    $region7: #{tpu_custom_call.1} parent=1 // pred_check_branch
      %23 = sbr.rel (0) target = $region9
    $region8: #{tpu_custom_call.1} parent=1 // pred_region
      _
    $region9: #{tpu_custom_call.1} parent=1 // pred_fallthru
      _
    // Predicated region
    $region10: #{tpu_custom_call.1} parent=1 // pred_check
      _
    $region11: #{tpu_custom_call.1} parent=1 // pred_check_branch
      %25 = sbr.rel (0) target = $region13
    $region12: #{tpu_custom_call.1} parent=1 // pred_region
      %26 = dma.done [#allocation4], 256
    $region13: #{tpu_custom_call.1} parent=1 // pred_fallthru
      _
    %s27 = sld [smem:[#allocation2]]
    %s28 = sadd.s32 %s27, 0
    %v29 = vlaneseq
    %v30 = vstv %s28
    %v31 = vxor.u32 %v30, %v30
    %v32 = vxor.u32 %v31, 466688986
    %v33 = vadd.s32 %v29, %v30
    %v34 = vadd.s32 %v33, %v33
    %v35 = vshll.u32 %v33, 13
    %v36 = vshrl.u32 %v33, 19
    %v37 = vor.u32 %v35, %v36
    %v38 = vxor.u32 %v34, %v37
    %v39 = vadd.s32 %v34, %v38
    %v40 = vshll.u32 %v38, 15
    %v41 = vshrl.u32 %v38, 17
    %v42 = vor.u32 %v40, %v41
    %v43 = vxor.u32 %v39, %v42
    %v44 = vadd.s32 %v39, %v43
    %v45 = vshll.u32 %v43, 26
    %v46 = vshrl.u32 %v43, 6
    %v47 = vor.u32 %v45, %v46
    %v48 = vxor.u32 %v44, %v47
    %v49 = vadd.s32 %v44, %v48
    %v50 = vshll.u32 %v48, 6
    %v51 = vshrl.u32 %v48, 26
    %v52 = vor.u32 %v50, %v51
    %v53 = vxor.u32 %v49, %v52
    %v54 = vadd.s32 %v49, %v30
    %v55 = vadd.s32 %v53, %v32
    %v56 = vadd.s32 %v55, 1
    %v57 = vadd.s32 %v54, %v56
    %v58 = vshll.u32 %v56, 17
    %v59 = vshrl.u32 %v56, 15
    %v60 = vor.u32 %v58, %v59
    %v61 = vxor.u32 %v57, %v60
    %v62 = vadd.s32 %v57, %v61
    %v63 = vshll.u32 %v61, 29
    %v64 = vshrl.u32 %v61, 3
    %v65 = vor.u32 %v63, %v64
    %v66 = vxor.u32 %v62, %v65
    %v67 = vadd.s32 %v62, %v66
    %v68 = vshll.u32 %v66, 16
    %v69 = vshrl.u32 %v66, 16
    %v70 = vor.u32 %v68, %v69
    %v71 = vxor.u32 %v67, %v70
    %v72 = vadd.s32 %v67, %v71
    %v73 = vshll.u32 %v71, 24
    %v74 = vshrl.u32 %v71, 8
    %v75 = vor.u32 %v73, %v74
    %v76 = vxor.u32 %v72, %v75
    %v77 = vadd.s32 %v72, %v32
    %v78 = vadd.s32 %v76, %v30
    %v79 = vadd.s32 %v78, 2
    %v80 = vadd.s32 %v77, %v79
    %v81 = vshll.u32 %v79, 13
    %v82 = vshrl.u32 %v79, 19
    %v83 = vor.u32 %v81, %v82
    %v84 = vxor.u32 %v80, %v83
    %v85 = vadd.s32 %v80, %v84
    %v86 = vshll.u32 %v84, 15
    %v87 = vshrl.u32 %v84, 17
    %v88 = vor.u32 %v86, %v87
    %v89 = vxor.u32 %v85, %v88
    %v90 = vadd.s32 %v85, %v89
    %v91 = vshll.u32 %v89, 26
    %v92 = vshrl.u32 %v89, 6
    %v93 = vor.u32 %v91, %v92
    %v94 = vxor.u32 %v90, %v93
    %v95 = vadd.s32 %v90, %v94
    %v96 = vshll.u32 %v94, 6
    %v97 = vshrl.u32 %v94, 26
    %v98 = vor.u32 %v96, %v97
    %v99 = vxor.u32 %v95, %v98
    %v100 = vadd.s32 %v95, %v30
    %v101 = vadd.s32 %v99, %v30
    %v102 = vadd.s32 %v101, 3
    %v103 = vadd.s32 %v100, %v102
    %v104 = vshll.u32 %v102, 17
    %v105 = vshrl.u32 %v102, 15
    %v106 = vor.u32 %v104, %v105
    %v107 = vxor.u32 %v103, %v106
    %v108 = vadd.s32 %v103, %v107
    %v109 = vshll.u32 %v107, 29
    %v110 = vshrl.u32 %v107, 3
    %v111 = vor.u32 %v109, %v110
    %v112 = vxor.u32 %v108, %v111
    %v113 = vadd.s32 %v108, %v112
    %v114 = vshll.u32 %v112, 16
    %v115 = vshrl.u32 %v112, 16
    %v116 = vor.u32 %v114, %v115
    %v117 = vxor.u32 %v113, %v116
    %v118 = vadd.s32 %v113, %v117
    %v119 = vshll.u32 %v117, 24
    %v120 = vshrl.u32 %v117, 8
    %v121 = vor.u32 %v119, %v120
    %v122 = vxor.u32 %v118, %v121
    %v123 = vadd.s32 %v118, %v30
    %v124 = vadd.s32 %v122, %v32
    %v125 = vadd.s32 %v124, 4
    %v126 = vadd.s32 %v123, %v125
    %v127 = vshll.u32 %v125, 13
    %v128 = vshrl.u32 %v125, 19
    %v129 = vor.u32 %v127, %v128
    %v130 = vxor.u32 %v126, %v129
    %v131 = vadd.s32 %v126, %v130
    %v132 = vshll.u32 %v130, 15
    %v133 = vshrl.u32 %v130, 17
    %v134 = vor.u32 %v132, %v133
    %v135 = vxor.u32 %v131, %v134
    %v136 = vadd.s32 %v131, %v135
    %v137 = vshll.u32 %v135, 26
    %v138 = vshrl.u32 %v135, 6
    %v139 = vor.u32 %v137, %v138
    %v140 = vxor.u32 %v136, %v139
    %v141 = vadd.s32 %v136, %v140
    %v142 = vshll.u32 %v140, 6
    %v143 = vshrl.u32 %v140, 26
    %v144 = vor.u32 %v142, %v143
    %v145 = vxor.u32 %v141, %v144
    %v146 = vadd.s32 %v141, %v32
    %v147 = vadd.s32 %v145, %v30
    %v148 = vadd.s32 %v147, 5
    %v149 = vxor.u32 %v146, %v148
    %150 = set.rngseed %v149
    %v151 = vrng
    %v152 = vrng
    %v153 = vshrl.u32 %v151, 9
    %v154 = vshrl.u32 %v152, 9
    %v155 = vor.u32 %v153, 1065353216
    %v156 = vor.u32 %v154, 1065353216
    %v159 = vsub.f32 %v155, 1.0
    %v160 = vsub.f32 %v156, 1.0
    %v161 = vmul.f32 %v159, 2.0
    %v162 = vmul.f32 %v160, 2.0
    %v163 = vadd.f32 %v161, -0.99999994
    %v164 = vadd.f32 %v162, -0.99999994
    %v165 = vmax.f32 %v163, -0.99999994
    %v166 = vmax.f32 %v164, -0.99999994
    %v167 = vsub.f32 0.0, %v165
    %v168 = vsub.f32 0.0, %v166
    %v169 = vmul.f32 %v165, %v167
    %v170 = vmul.f32 %v166, %v168
    %v171 = vadd.f32 %v169, 1.0
    %v172 = vlog2.pop %v171
    %v173 = vmul.f32 %v172, 0.6931472
    %v174 = vmul.f32 -0.5, %v169
    %v175 = vadd.f32 %v174, 1.0
    %v176 = vmul.f32 %v175, %v169
    %v177 = vand.u32 2147483647, %v169
    %vm178 = vcmp.lt.f32.partialorder %v177, 0.0004427343
    %v179 = vsel %vm178, %v176, %v173
    %v180 = vadd.f32 %v170, 1.0
    %v181 = vlog2.pop %v180
    %v182 = vmul.f32 %v181, 0.6931472
    %v183 = vmul.f32 -0.5, %v170
    %v184 = vadd.f32 %v183, 1.0
    %v185 = vmul.f32 %v184, %v170
    %v186 = vand.u32 2147483647, %v170
    %vm187 = vcmp.lt.f32.partialorder %v186, 0.0004427343
    %v188 = vsel %vm187, %v185, %v182
    %v189 = vsub.f32 0.0, %v179
    %v190 = vsub.f32 0.0, %v188
    %vm191 = vcmp.lt.f32.partialorder %v189, 5.0
    %vm192 = vcmp.lt.f32.partialorder %v190, 5.0
    %v193 = vsub.f32 %v189, 2.5
    %v194 = vsub.f32 %v190, 2.5
    %v195 = vrsqrt.pop %v189
    %v196 = vmul.f32 %v189, %v195
    %vm197 = vcmp.eq.f32.partialorder %v189, inf
    %v198 = vsel %vm197, %v189, %v196
    %vm199 = vcmp.eq.f32.partialorder %v189, 0.0
    %v200 = vand.u32 %v189, 2147483648
    %v201 = vsel %vm199, %v200, %v198
    %v202 = vrsqrt.pop %v190
    %v203 = vmul.f32 %v190, %v202
    %vm204 = vcmp.eq.f32.partialorder %v190, inf
    %v205 = vsel %vm204, %v190, %v203
    %vm206 = vcmp.eq.f32.partialorder %v190, 0.0
    %v207 = vand.u32 %v190, 2147483648
    %v208 = vsel %vm206, %v207, %v205
    %v209 = vsub.f32 %v201, 3.0
    %v210 = vsub.f32 %v208, 3.0
    %v211 = vsel %vm191, %v193, %v209
    %v212 = vsel %vm192, %v194, %v210
    %v213 = vsel %vm191, 2.8102264e-08, -0.00020021426
    %v214 = vsel %vm192, 2.8102264e-08, -0.00020021426
    %v215 = vsel %vm191, 3.4327394e-07, 0.00010095056
    %v216 = vsel %vm192, 3.4327394e-07, 0.00010095056
    %v217 = vmul.f32 %v213, %v211
    %v218 = vmul.f32 %v214, %v212
    %v219 = vadd.f32 %v215, %v217
    %v220 = vadd.f32 %v216, %v218
    %v221 = vsel %vm191, -3.5233877e-06, 0.0013493432
    %v222 = vsel %vm192, -3.5233877e-06, 0.0013493432
    %v223 = vmul.f32 %v219, %v211
    %v224 = vmul.f32 %v220, %v212
    %v225 = vadd.f32 %v221, %v223
    %v226 = vadd.f32 %v222, %v224
    %v227 = vsel %vm191, -4.3915065e-06, -0.0036734284
    %v228 = vsel %vm192, -4.3915065e-06, -0.0036734284
    %v229 = vmul.f32 %v225, %v211
    %v230 = vmul.f32 %v226, %v212
    %v231 = vadd.f32 %v227, %v229
    %v232 = vadd.f32 %v228, %v230
    %v233 = vsel %vm191, 0.00021858087, 0.0057395077
    %v234 = vsel %vm192, 0.00021858087, 0.0057395077
    %v235 = vmul.f32 %v231, %v211
    %v236 = vmul.f32 %v232, %v212
    %v237 = vadd.f32 %v233, %v235
    %v238 = vadd.f32 %v234, %v236
    %v239 = vsel %vm191, -0.001253725, -0.0076224613
    %v240 = vsel %vm192, -0.001253725, -0.0076224613
    %v241 = vmul.f32 %v237, %v211
    %v242 = vmul.f32 %v238, %v212
    %v243 = vadd.f32 %v239, %v241
    %v244 = vadd.f32 %v240, %v242
    %v245 = vsel %vm191, -0.0041776816, 0.0094388705
    %v246 = vsel %vm192, -0.0041776816, 0.0094388705
    %v247 = vmul.f32 %v243, %v211
    %v248 = vmul.f32 %v244, %v212
    %v249 = vadd.f32 %v245, %v247
    %v250 = vadd.f32 %v246, %v248
    %v251 = vsel %vm191, 0.24664073, 1.001674
    %v252 = vsel %vm192, 0.24664073, 1.001674
    %v253 = vmul.f32 %v249, %v211
    %v254 = vmul.f32 %v250, %v212
    %v255 = vadd.f32 %v251, %v253
    %v256 = vadd.f32 %v252, %v254
    %v257 = vsel %vm191, 1.5014094, 2.8329768
    %v258 = vsel %vm192, 1.5014094, 2.8329768
    %v259 = vmul.f32 %v255, %v211
    %v260 = vmul.f32 %v256, %v212
    %v261 = vadd.f32 %v257, %v259
    %v262 = vadd.f32 %v258, %v260
    %v263 = vand.u32 2147483647, %v165
    %v264 = vand.u32 2147483647, %v166
    %vm265 = vcmp.eq.f32.partialorder %v263, 1.0
    %vm266 = vcmp.eq.f32.partialorder %v264, 1.0
    %v267 = vmul.f32 %v165, inf
    %v268 = vmul.f32 %v166, inf
    %v269 = vmul.f32 %v261, %v165
    %v270 = vmul.f32 %v262, %v166
    %v271 = vsel %vm265, %v267, %v269
    %v272 = vsel %vm266, %v268, %v270
    %v273 = vmul.f32 %v271, 1.4142135
    %v274 = vmul.f32 %v272, 1.4142135
    %v275 = vld [vmem:[#allocation3] sm:$0xff]
    %v276 = vld [vmem:[#allocation3 + $0x8] sm:$0xff]
    %v277 = vmul.f32 %v273, 0.1
    %v278 = vmul.f32 %v274, 0.1
    %v279 = vadd.f32 %v277, 1.0
    %v280 = vadd.f32 %v278, 1.0
    %v281 = vmul.f32 %v275, %v279
    %v282 = vmul.f32 %v276, %v280
    %283 = vst [vmem:[#allocation6] sm:$0xff] %v281
    %284 = vst [vmem:[#allocation6 + $0x8] sm:$0xff] %v282
    // Predicated region
    $region14: #{tpu_custom_call.1} parent=1 // pred_check
      _
    $region15: #{tpu_custom_call.1} parent=1 // pred_check_branch
      %286 = sbr.rel (0) target = $region17
    $region16: #{tpu_custom_call.1} parent=1 // pred_region
      %s288 = ssub.s32 256, 256
      %289 = vsyncadd [#allocation5], %s288
      %s290 = sshll.u32 [#allocation6], 4
      %s291 = int_to_ptr.vmem [resolvable:$true] %s290
      %296 = dma.vmem_to_hbm [thread:$0]  %s291, 256, %s2, [#allocation5], 128, 128, 8
    $region17: #{tpu_custom_call.1} parent=1 // pred_fallthru
      _
    // Predicated region
    $region18: #{tpu_custom_call.1} parent=1 // pred_check
      _
    $region19: #{tpu_custom_call.1} parent=1 // pred_check_branch
      %298 = sbr.rel (0) target = $region21
    $region20: #{tpu_custom_call.1} parent=1 // pred_region
      %299 = dma.done [#allocation5], 256
    $region21: #{tpu_custom_call.1} parent=1 // pred_fallthru
      _
    %300 = vsyncpa [#allocation4], 1
    %301 = vsyncpa [#allocation5], 1

// kernel: tpu_custom_call.1
$region0: #{tpu_custom_call.1}
  #allocation0 [shape = 'u32[]', space=smem, size = 0x4, offset = 0x4, fixed_abs, tag = 'smem constant byte address 0x4 - core index']
  #allocation1 [shape = 'u32[144,128]{1,0:T(1,128)}', space=vmem, size = 0x12000, scoped, tag = 'internal scratch']
  %s0 = inlined_call_operand.hbm [shape: f32[16,128], index: 0, kind: input, shape index: {}, may-alias: {0,2}]
  %s1 = inlined_call_operand.vmem [shape: f32[16,128], index: 1, kind: input, shape index: {}]
  %s2 = inlined_call_operand.hbm [shape: f32[16,128], index: 2, kind: output, shape index: {}, may-alias: {0,2}]
  %s3 = sld [smem:[#allocation0]]
  $region22: #{tpu_custom_call.1} parent=0
    _
  %s5 = ssub.s32 1, %s3
  %s6 = scalar_select 0, %s5, %s3
  $region1: #{tpu_custom_call.1} parent=0
    #allocation2 [shape = 'u8[8192]{0}', space=vmem, size = 0x2000, scoped, tag = 'input window, operand 0, single buffered']
    #allocation3 [shape = 's32[1]{0}', space=sflag, size = 0x4, scoped, tag = 'scoped memory for tpu_custom_call.1']
    #allocation4 [shape = 's32[1]{0}', space=sflag, size = 0x4, scoped, tag = 'scoped memory for tpu_custom_call.1']
    #allocation5 [shape = 'u8[8192]{0}', space=vmem, size = 0x2000, scoped, tag = 'output window, operand 0, single buffered']
    %7 = vsyncpa [#allocation3], 0
    %8 = vsyncpa [#allocation4], 0
    // Predicated region
    $region2: #{tpu_custom_call.1} parent=1 // pred_check
      _
    $region3: #{tpu_custom_call.1} parent=1 // pred_check_branch
      %10 = sbr.rel (0) target = $region5
    $region4: #{tpu_custom_call.1} parent=1 // pred_region
      %s12 = ssub.s32 256, 256
      %13 = vsyncadd [#allocation3], %s12
      %s14 = sshll.u32 [#allocation2], 4
      %s15 = int_to_ptr.vmem [resolvable:$true] %s14
      %20 = dma.hbm_to_vmem [thread:$0]  %s0, 256, %s15, [#allocation3], 128, 128, 8
    $region5: #{tpu_custom_call.1} parent=1 // pred_fallthru
      _
    // Predicated region
    $region6: #{tpu_custom_call.1} parent=1 // pred_check
      _
    $region7: #{tpu_custom_call.1} parent=1 // pred_check_branch
      %22 = sbr.rel (0) target = $region9
    $region8: #{tpu_custom_call.1} parent=1 // pred_region
      _
    $region9: #{tpu_custom_call.1} parent=1 // pred_fallthru
      _
    // Predicated region
    $region10: #{tpu_custom_call.1} parent=1 // pred_check
      _
    $region11: #{tpu_custom_call.1} parent=1 // pred_check_branch
      %24 = sbr.rel (0) target = $region13
    $region12: #{tpu_custom_call.1} parent=1 // pred_region
      %25 = dma.done [#allocation3], 256
    $region13: #{tpu_custom_call.1} parent=1 // pred_fallthru
      _
    %v26 = vld [vmem:[#allocation2] sm:$0xff]
    %v27 = vld [vmem:[#allocation2 + $0x8] sm:$0xff]
    %v28 = vld [vmem:[%s1] sm:$0xff]
    %v29 = vld [vmem:[%s1 + $0x8] sm:$0xff]
    %v30 = vmul.f32 %v28, 0.1
    %v31 = vmul.f32 %v29, 0.1
    %v32 = vadd.f32 %v30, 1.0
    %v33 = vadd.f32 %v31, 1.0
    %v34 = vmul.f32 %v26, %v32
    %v35 = vmul.f32 %v27, %v33
    %36 = vst [vmem:[#allocation5] sm:$0xff] %v34
    %37 = vst [vmem:[#allocation5 + $0x8] sm:$0xff] %v35
    // Predicated region
    $region14: #{tpu_custom_call.1} parent=1 // pred_check
      _
    $region15: #{tpu_custom_call.1} parent=1 // pred_check_branch
      %39 = sbr.rel (0) target = $region17
    $region16: #{tpu_custom_call.1} parent=1 // pred_region
      %s41 = ssub.s32 256, 256
      %42 = vsyncadd [#allocation4], %s41
      %s43 = sshll.u32 [#allocation5], 4
      %s44 = int_to_ptr.vmem [resolvable:$true] %s43
      %49 = dma.vmem_to_hbm [thread:$0]  %s44, 256, %s2, [#allocation4], 128, 128, 8
    $region17: #{tpu_custom_call.1} parent=1 // pred_fallthru
      _
    // Predicated region
    $region18: #{tpu_custom_call.1} parent=1 // pred_check
      _
    $region19: #{tpu_custom_call.1} parent=1 // pred_check_branch
      %51 = sbr.rel (0) target = $region21
    $region20: #{tpu_custom_call.1} parent=1 // pred_region
      %52 = dma.done [#allocation4], 256
    $region21: #{tpu_custom_call.1} parent=1 // pred_fallthru
      _
    %53 = vsyncpa [#allocation3], 1
    %54 = vsyncpa [#allocation4], 1

</llo_original>
